<compile_context>
chip_gen: v7x
topology: tpu7x:2x2x1
jax: 0.10.0
libtpu: 0.0.40
codegen_flags: <defaults>
</compile_context>

<pallas_src>
import jax
import jax.numpy as jnp
from jax.experimental import pallas as pl
from jax.experimental.pallas import tpu as pltpu


# ----------------------------------------------------------------------------
# Kernels
# ----------------------------------------------------------------------------
def _towers(x, e, w1, w2, b2, w3, b3, wc1, bc1, wc2, bc2):
    """Fused block-diagonal MLP body.  x:(TB,Kp) bf16, e:(TB,192) f32."""
    f32 = jnp.float32
    relu = lambda v: jnp.maximum(v, 0.0)
    dot = lambda a, w: jnp.dot(a.astype(w.dtype), w, preferred_element_type=f32)

    h = relu(dot(x, w1) + e)      # (TB,192) = [user hidden1 | item hidden1]
    h = relu(dot(h, w2) + b2)     # (TB,128) = [user hidden2 | item hidden2]
    h = dot(h, w3) + b3           # (TB, 64) = [logits_u | logits_i]
    h = relu(dot(h, wc1) + bc1)   # (TB, 64) classifier hidden
    z = dot(h, wc2) + bc2         # (TB,128) (only lanes 0:2 meaningful)
    return z[:, :2]


def _kernel_onehot(ids_ref, x_ref, utab_ref, itab_ref,
                   w1_ref, w2_ref, b2_ref, w3_ref, b3_ref,
                   wc1_ref, bc1_ref, wc2_ref, bc2_ref, out_ref):
    f32 = jnp.float32
    tb = ids_ref.shape[0]
    cu = utab_ref.shape[0]
    ci = itab_ref.shape[0]

    ids = ids_ref[...]                       # (TB, 2) int32
    uid = ids[:, 0:1]
    iid = ids[:, 1:2]

    # Exact f32 row gather via one-hot matmul (tables already include bias and
    # are zero-padded to the full 192 hidden lanes, user cols 0:64, item 64:192).
    oh_u = (uid == jax.lax.broadcasted_iota(jnp.int32, (tb, cu), 1)).astype(f32)
    oh_i = (iid == jax.lax.broadcasted_iota(jnp.int32, (tb, ci), 1)).astype(f32)
    e = (jnp.dot(oh_u, utab_ref[...], preferred_element_type=f32)
         + jnp.dot(oh_i, itab_ref[...], preferred_element_type=f32))

    out_ref[...] = _towers(x_ref[...], e,
                           w1_ref[...], w2_ref[...], b2_ref[...],
                           w3_ref[...], b3_ref[...],
                           wc1_ref[...], bc1_ref[...],
                           wc2_ref[...], bc2_ref[...])


def _kernel_pregathered(x_ref, e_ref,
                        w1_ref, w2_ref, b2_ref, w3_ref, b3_ref,
                        wc1_ref, bc1_ref, wc2_ref, bc2_ref, out_ref):
    out_ref[...] = _towers(x_ref[...], e_ref[...].astype(jnp.float32),
                           w1_ref[...], w2_ref[...], b2_ref[...],
                           w3_ref[...], b3_ref[...],
                           wc1_ref[...], bc1_ref[...],
                           wc2_ref[...], bc2_ref[...])


# ----------------------------------------------------------------------------
# Parameters / wrapper
# ----------------------------------------------------------------------------
def init_params(key, userCount, itemCount, user_embSize=32, item_embSize=32):
    """Deterministic synthetic parameters matching the PyTorch module shapes."""
    keys = jax.random.split(key, 10)

    def lin(k, fan_in, fan_out):
        kw, kb = jax.random.split(k)
        bound = 1.0 / (fan_in ** 0.5)
        w = jax.random.uniform(kw, (fan_in, fan_out), jnp.float32, -bound, bound)
        b = jax.random.uniform(kb, (1, fan_out), jnp.float32, -bound, bound)
        return w, b

    item_input_size = 404 + item_embSize
    return {
        "userEmb": jax.random.normal(keys[0], (userCount, user_embSize), jnp.float32),
        "itemEmb": jax.random.normal(keys[1], (itemCount, item_embSize), jnp.float32),
        "u1": lin(keys[2], 36, 64),
        "u2": lin(keys[3], 64, 64),
        "u3": lin(keys[4], 64, user_embSize),
        "i1": lin(keys[5], item_input_size, 128),
        "i2": lin(keys[6], 128, 64),
        "i3": lin(keys[7], 64, item_embSize),
        "c1": lin(keys[8], user_embSize + item_embSize, 64),
        "c2": lin(keys[9], 64, 2),
    }


def _round_up(x, m):
    return (x + m - 1) // m * m


def _cdiv(a, b):
    return (a + b - 1) // b


def cls_forward(params, dataUser, dataItem, *, block_rows=2048, max_onehot_rows=4096):
    f32, bf16 = jnp.float32, jnp.bfloat16

    B = dataUser.shape[0]
    n_uf = dataUser.shape[1] - 1          # 4 user features
    n_if = dataItem.shape[1] - 1          # 404 item features
    uid = dataUser[:, 0].astype(jnp.int32)
    iid = dataItem[:, 0].astype(jnp.int32)

    wu1, bu1 = params["u1"]; wu2, bu2 = params["u2"]; wu3, bu3 = params["u3"]
    wi1, bi1 = params["i1"]; wi2, bi2 = params["i2"]; wi3, bi3 = params["i3"]
    wc1, bc1 = params["c1"]; wc2, bc2 = params["c2"]

    H1U, H1I = wu1.shape[1], wi1.shape[1]   # 64, 128
    H1 = H1U + H1I                          # 192
    H2U, H2I = wu2.shape[1], wi2.shape[1]   # 64, 64
    H2 = H2U + H2I                          # 128
    H3U, H3I = wu3.shape[1], wi3.shape[1]   # 32, 32
    H3 = H3U + H3I                          # 64
    HC = wc1.shape[1]                       # 64
    n_out = wc2.shape[1]                    # 2
    OUT_PAD = 128

    # --- combined feature stream: [userFeat(4) | itemFeat(404) | zero pad] bf16
    K = n_uf + n_if
    K_pad = _round_up(K, 16)                # clean bf16 sublane packing on the K dim
    x = jnp.concatenate([dataUser[:, 1:], dataItem[:, 1:]], axis=1).astype(bf16)
    if K_pad != K:
        x = jnp.pad(x, ((0, 0), (0, K_pad - K)))

    # --- block-diagonal fused weights (user block first, item block second)
    w1 = (jnp.zeros((K_pad, H1), f32)
          .at[:n_uf, :H1U].set(wu1[:n_uf])
          .at[n_uf:K, H1U:].set(wi1[:n_if])).astype(bf16)
    w2 = (jnp.zeros((H1, H2), f32)
          .at[:H1U, :H2U].set(wu2)
          .at[H1U:, H2U:].set(wi2)).astype(bf16)
    b2 = jnp.concatenate([bu2, bi2], axis=1)                 # (1, 128)
    w3 = (jnp.zeros((H2, H3), f32)
          .at[:H2U, :H3U].set(wu3)
          .at[H2U:, H3U:].set(wi3)).astype(bf16)
    b3 = jnp.concatenate([bu3, bi3], axis=1)                 # (1, 64)
    wc1b = wc1.astype(bf16)                                  # (64, 64)
    wc2p = jnp.zeros((HC, OUT_PAD), f32).at[:, :n_out].set(wc2).astype(bf16)
    bc2p = jnp.zeros((1, OUT_PAD), f32).at[:, :n_out].set(bc2)

    # --- first-layer embedding contribution tables (first-layer bias folded in)
    u_tab = params["userEmb"] @ wu1[n_uf:] + bu1             # (CU, 64)  f32
    i_tab = params["itemEmb"] @ wi1[n_if:] + bi1             # (CI, 128) f32
    CU, CI = u_tab.shape[0], i_tab.shape[0]

    # --- batch tiling: partial last block instead of jnp.pad; >=2 blocks when
    #     the batch allows it so 'parallel' can shard across both v7x cores.
    TB = min(block_rows, _round_up(B, 16))
    if B <= TB and B > 32:
        TB = _round_up(_cdiv(B, 2), 16)
    TB = max(8, min(TB, _round_up(B, 8)))
    grid = (_cdiv(B, TB),)

    shared_weights = (w1, w2, b2, w3, b3, wc1b, bc1, wc2p, bc2p)
    resident = lambda a: pl.BlockSpec(a.shape, lambda i: (0, 0))   # VMEM-resident
    data_spec = lambda cols: pl.BlockSpec((TB, cols), lambda i: (i, 0))

    out_shape = jax.ShapeDtypeStruct((B, n_out), f32)
    out_spec = pl.BlockSpec((TB, n_out), lambda i: (i, 0))         # narrow writeback
    cparams = pltpu.CompilerParams(
        dimension_semantics=("parallel",),
        vmem_limit_bytes=48 * 1024 * 1024)

    if CU <= max_onehot_rows and CI <= max_onehot_rows:
        # In-kernel exact gather via one-hot matmul on VMEM-resident tables.
        CU_pad = _round_up(CU, 8)
        CI_pad = _round_up(CI, 8)
        utab = jnp.zeros((CU_pad, H1), f32).at[:CU, :H1U].set(u_tab)
        itab = jnp.zeros((CI_pad, H1), f32).at[:CI, H1U:].set(i_tab)
        ids = jnp.stack([uid, iid], axis=1)                  # (B, 2) int32
        in_specs = ([data_spec(2), data_spec(K_pad), resident(utab), resident(itab)]
                    + [resident(a) for a in shared_weights])
        out = pl.pallas_call(
            _kernel_onehot,
            out_shape=out_shape,
            grid=grid,
            in_specs=in_specs,
            out_specs=out_spec,
            compiler_params=cparams,
        )(ids, x, utab, itab, *shared_weights)
    else:
        # Fallback for huge embedding tables: gather once in the wrapper, stream bf16.
        e = jnp.concatenate([jnp.take(u_tab, uid, axis=0),
                             jnp.take(i_tab, iid, axis=0)], axis=1).astype(bf16)
        in_specs = ([data_spec(K_pad), data_spec(H1)]
                    + [resident(a) for a in shared_weights])
        out = pl.pallas_call(
            _kernel_pregathered,
            out_shape=out_shape,
            grid=grid,
            in_specs=in_specs,
            out_specs=out_spec,
            compiler_params=cparams,
        )(x, e, *shared_weights)
    return out


# ----------------------------------------------------------------------------
# Pure-JAX reference + test
# ----------------------------------------------------------------------------
def cls_forward_ref(params, dataUser, dataItem):
    relu = lambda v: jnp.maximum(v, 0.0)
    uid = dataUser[:, 0].astype(jnp.int32)
    iid = dataItem[:, 0].astype(jnp.int32)
    embu = jnp.take(params["userEmb"], uid, axis=0)
    embi = jnp.take(params["itemEmb"], iid, axis=0)
    inputU = jnp.concatenate([dataUser[:, 1:].astype(jnp.float32), embu], axis=1)
    inputI = jnp.concatenate([dataItem[:, 1:].astype(jnp.float32), embi], axis=1)
    wu1, bu1 = params["u1"]; wu2, bu2 = params["u2"]; wu3, bu3 = params["u3"]
    wi1, bi1 = params["i1"]; wi2, bi2 = params["i2"]; wi3, bi3 = params["i3"]
    wc1, bc1 = params["c1"]; wc2, bc2 = params["c2"]
    lu = relu(inputU @ wu1 + bu1)
    lu = relu(lu @ wu2 + bu2)
    lu = lu @ wu3 + bu3
    li = relu(inputI @ wi1 + bi1)
    li = relu(li @ wi2 + bi2)
    li = li @ wi3 + bi3
    h = relu(jnp.concatenate([lu, li], axis=1) @ wc1 + bc1)
    return h @ wc2 + bc2


def _make_inputs(key, B, userCount, itemCount):
    k_uid, k_iid, k_ufeat, k_ifeat = jax.random.split(key, 4)
    uid = jax.random.randint(k_uid, (B,), 0, userCount)
    iid = jax.random.randint(k_iid, (B,), 0, itemCount)
    dataUser = jnp.concatenate(
        [uid[:, None].astype(jnp.float32),
         jax.random.normal(k_ufeat, (B, 4), jnp.float32)], axis=1)      # (B, 5)
    dataItem = jnp.concatenate(
        [iid[:, None].astype(jnp.float32),
         jax.random.normal(k_ifeat, (B, 404), jnp.float32)], axis=1)    # (B, 405)
    return dataUser, dataItem


if __name__ == "__main__":
    userCount, itemCount = 10, 20
    key = jax.random.PRNGKey(0)
    k_data, k_data2, k_params = jax.random.split(key, 3)
    params = init_params(k_params, userCount, itemCount)

    # Small batch (single exact tile), in-kernel one-hot gather path.
    dataUser, dataItem = _make_inputs(k_data, 8, userCount, itemCount)
    logits = cls_forward(params, dataUser, dataItem)
    jax.block_until_ready(logits)
    assert logits.shape == (8, 2) and logits.dtype == jnp.float32
    ref = cls_forward_ref(params, dataUser, dataItem)
    assert float(jnp.max(jnp.abs(logits - ref))) < 0.1   # bf16-matmul tolerance

    # Odd batch with a small tile: multi-step grid + partial (masked) last block.
    dataUser2, dataItem2 = _make_inputs(k_data2, 37, userCount, itemCount)
    logits2 = cls_forward(params, dataUser2, dataItem2, block_rows=16)
    jax.block_until_ready(logits2)
    assert logits2.shape == (37, 2)
    ref2 = cls_forward_ref(params, dataUser2, dataItem2)
    assert float(jnp.max(jnp.abs(logits2 - ref2))) < 0.1

    # Force the pre-gathered fallback (large-embedding-table mode) for coverage.
    logits3 = cls_forward(params, dataUser2, dataItem2, max_onehot_rows=0)
    jax.block_until_ready(logits3)
    assert float(jnp.max(jnp.abs(logits3 - ref2))) < 0.1

    print("KERNEL_OK")
</pallas_src>

<mosaic_0001>
module attributes {stable_mosaic.version = 11 : i64} {
  func.func @_kernel_onehot(%arg0: i32, %arg1: memref<8x2xi32, #tpu.memory_space<vmem>>, %arg2: memref<8x416xbf16, #tpu.memory_space<vmem>>, %arg3: memref<16x192xf32, #tpu.memory_space<vmem>>, %arg4: memref<24x192xf32, #tpu.memory_space<vmem>>, %arg5: memref<416x192xbf16, #tpu.memory_space<vmem>>, %arg6: memref<192x128xbf16, #tpu.memory_space<vmem>>, %arg7: memref<1x128xf32, #tpu.memory_space<vmem>>, %arg8: memref<128x64xbf16, #tpu.memory_space<vmem>>, %arg9: memref<1x64xf32, #tpu.memory_space<vmem>>, %arg10: memref<64x64xbf16, #tpu.memory_space<vmem>>, %arg11: memref<1x64xf32, #tpu.memory_space<vmem>>, %arg12: memref<64x128xbf16, #tpu.memory_space<vmem>>, %arg13: memref<1x128xf32, #tpu.memory_space<vmem>>, %arg14: memref<8x2xf32, #tpu.memory_space<vmem>>) attributes {dimension_semantics = [#tpu.dimension_semantics<parallel>], iteration_bounds = array<i64: 1>, scalar_prefetch = 0 : i64, scratch_operands = 0 : i64, tpu.core_type = #tpu.core_type<tc>, window_params = [{transform_indices = @transform_0, window_bounds = array<i64: 8, 2>}, {transform_indices = @transform_1, window_bounds = array<i64: 8, 416>}, {pipeline_mode = #tpu.pipeline_mode<synchronous>, transform_indices = @transform_2, window_bounds = array<i64: 16, 192>}, {pipeline_mode = #tpu.pipeline_mode<synchronous>, transform_indices = @transform_3, window_bounds = array<i64: 24, 192>}, {pipeline_mode = #tpu.pipeline_mode<synchronous>, transform_indices = @transform_4, window_bounds = array<i64: 416, 192>}, {pipeline_mode = #tpu.pipeline_mode<synchronous>, transform_indices = @transform_5, window_bounds = array<i64: 192, 128>}, {pipeline_mode = #tpu.pipeline_mode<synchronous>, transform_indices = @transform_6, window_bounds = array<i64: 1, 128>}, {pipeline_mode = #tpu.pipeline_mode<synchronous>, transform_indices = @transform_7, window_bounds = array<i64: 128, 64>}, {pipeline_mode = #tpu.pipeline_mode<synchronous>, transform_indices = @transform_8, window_bounds = array<i64: 1, 64>}, {pipeline_mode = #tpu.pipeline_mode<synchronous>, transform_indices = @transform_9, window_bounds = array<i64: 64, 64>}, {pipeline_mode = #tpu.pipeline_mode<synchronous>, transform_indices = @transform_10, window_bounds = array<i64: 1, 64>}, {pipeline_mode = #tpu.pipeline_mode<synchronous>, transform_indices = @transform_11, window_bounds = array<i64: 64, 128>}, {pipeline_mode = #tpu.pipeline_mode<synchronous>, transform_indices = @transform_12, window_bounds = array<i64: 1, 128>}, {transform_indices = @transform_13, window_bounds = array<i64: 8, 2>}]} {
    %c0 = arith.constant 0 : index
    %c0_0 = arith.constant 0 : index
    %0 = vector.load %arg1[%c0, %c0_0] : memref<8x2xi32, #tpu.memory_space<vmem>>, vector<8x2xi32>
    %1 = vector.extract_strided_slice %0 {offsets = [0, 0], sizes = [8, 1], strides = [1, 1]} : vector<8x2xi32> to vector<8x1xi32>
    %2 = vector.extract_strided_slice %0 {offsets = [0, 1], sizes = [8, 1], strides = [1, 1]} : vector<8x2xi32> to vector<8x1xi32>
    %3 = tpu.iota {dimensions = array<i32: 1>} : vector<8x16xi32>
    %4 = vector.broadcast %1 : vector<8x1xi32> to vector<8x16xi32>
    %5 = arith.cmpi eq, %4, %3 : vector<8x16xi32>
    %6 = arith.extui %5 : vector<8x16xi1> to vector<8x16xi32>
    %7 = arith.sitofp %6 : vector<8x16xi32> to vector<8x16xf32>
    %8 = tpu.iota {dimensions = array<i32: 1>} : vector<8x24xi32>
    %9 = vector.broadcast %2 : vector<8x1xi32> to vector<8x24xi32>
    %10 = arith.cmpi eq, %9, %8 : vector<8x24xi32>
    %11 = arith.extui %10 : vector<8x24xi1> to vector<8x24xi32>
    %12 = arith.sitofp %11 : vector<8x24xi32> to vector<8x24xf32>
    %c0_1 = arith.constant 0 : index
    %c0_2 = arith.constant 0 : index
    %13 = vector.load %arg3[%c0_1, %c0_2] : memref<16x192xf32, #tpu.memory_space<vmem>>, vector<16x192xf32>
    %cst = arith.constant dense<0.000000e+00> : vector<8x192xf32>
    %14 = tpu.matmul %7, %13, %cst {dimension_numbers = #tpu.dot_dimension_numbers<[1], [0], [0], [1], [0, 0, 1, 1], [], []>} : vector<8x16xf32>, vector<16x192xf32>, vector<8x192xf32> -> vector<8x192xf32>
    %c0_3 = arith.constant 0 : index
    %c0_4 = arith.constant 0 : index
    %15 = vector.load %arg4[%c0_3, %c0_4] : memref<24x192xf32, #tpu.memory_space<vmem>>, vector<24x192xf32>
    %cst_5 = arith.constant dense<0.000000e+00> : vector<8x192xf32>
    %16 = tpu.matmul %12, %15, %cst_5 {dimension_numbers = #tpu.dot_dimension_numbers<[1], [0], [0], [1], [0, 0, 1, 1], [], []>} : vector<8x24xf32>, vector<24x192xf32>, vector<8x192xf32> -> vector<8x192xf32>
    %17 = arith.addf %14, %16 : vector<8x192xf32>
    %c0_6 = arith.constant 0 : index
    %c0_7 = arith.constant 0 : index
    %18 = vector.load %arg2[%c0_6, %c0_7] : memref<8x416xbf16, #tpu.memory_space<vmem>>, vector<8x416xbf16>
    %c0_8 = arith.constant 0 : index
    %c0_9 = arith.constant 0 : index
    %19 = vector.load %arg5[%c0_8, %c0_9] : memref<416x192xbf16, #tpu.memory_space<vmem>>, vector<416x192xbf16>
    %c0_10 = arith.constant 0 : index
    %c0_11 = arith.constant 0 : index
    %20 = vector.load %arg6[%c0_10, %c0_11] : memref<192x128xbf16, #tpu.memory_space<vmem>>, vector<192x128xbf16>
    %c0_12 = arith.constant 0 : index
    %c0_13 = arith.constant 0 : index
    %21 = vector.load %arg7[%c0_12, %c0_13] : memref<1x128xf32, #tpu.memory_space<vmem>>, vector<1x128xf32>
    %c0_14 = arith.constant 0 : index
    %c0_15 = arith.constant 0 : index
    %22 = vector.load %arg8[%c0_14, %c0_15] : memref<128x64xbf16, #tpu.memory_space<vmem>>, vector<128x64xbf16>
    %c0_16 = arith.constant 0 : index
    %c0_17 = arith.constant 0 : index
    %23 = vector.load %arg9[%c0_16, %c0_17] : memref<1x64xf32, #tpu.memory_space<vmem>>, vector<1x64xf32>
    %c0_18 = arith.constant 0 : index
    %c0_19 = arith.constant 0 : index
    %24 = vector.load %arg10[%c0_18, %c0_19] : memref<64x64xbf16, #tpu.memory_space<vmem>>, vector<64x64xbf16>
    %c0_20 = arith.constant 0 : index
    %c0_21 = arith.constant 0 : index
    %25 = vector.load %arg11[%c0_20, %c0_21] : memref<1x64xf32, #tpu.memory_space<vmem>>, vector<1x64xf32>
    %c0_22 = arith.constant 0 : index
    %c0_23 = arith.constant 0 : index
    %26 = vector.load %arg12[%c0_22, %c0_23] : memref<64x128xbf16, #tpu.memory_space<vmem>>, vector<64x128xbf16>
    %c0_24 = arith.constant 0 : index
    %c0_25 = arith.constant 0 : index
    %27 = vector.load %arg13[%c0_24, %c0_25] : memref<1x128xf32, #tpu.memory_space<vmem>>, vector<1x128xf32>
    %cst_26 = arith.constant dense<0.000000e+00> : vector<8x192xf32>
    %28 = tpu.matmul %18, %19, %cst_26 {dimension_numbers = #tpu.dot_dimension_numbers<[1], [0], [0], [1], [0, 0, 1, 1], [], []>} : vector<8x416xbf16>, vector<416x192xbf16>, vector<8x192xf32> -> vector<8x192xf32>
    %29 = arith.addf %28, %17 : vector<8x192xf32>
    %cst_27 = arith.constant 0.000000e+00 : f32
    %30 = vector.broadcast %cst_27 : f32 to vector<8x192xf32>
    %31 = arith.maximumf %29, %30 : vector<8x192xf32>
    %32 = arith.truncf %31 : vector<8x192xf32> to vector<8x192xbf16>
    %cst_28 = arith.constant dense<0.000000e+00> : vector<8x128xf32>
    %33 = tpu.matmul %32, %20, %cst_28 {dimension_numbers = #tpu.dot_dimension_numbers<[1], [0], [0], [1], [0, 0, 1, 1], [], []>} : vector<8x192xbf16>, vector<192x128xbf16>, vector<8x128xf32> -> vector<8x128xf32>
    %34 = vector.broadcast %21 : vector<1x128xf32> to vector<8x128xf32>
    %35 = arith.addf %33, %34 : vector<8x128xf32>
    %cst_29 = arith.constant 0.000000e+00 : f32
    %36 = vector.broadcast %cst_29 : f32 to vector<8x128xf32>
    %37 = arith.maximumf %35, %36 : vector<8x128xf32>
    %38 = arith.truncf %37 : vector<8x128xf32> to vector<8x128xbf16>
    %cst_30 = arith.constant dense<0.000000e+00> : vector<8x64xf32>
    %39 = tpu.matmul %38, %22, %cst_30 {dimension_numbers = #tpu.dot_dimension_numbers<[1], [0], [0], [1], [0, 0, 1, 1], [], []>} : vector<8x128xbf16>, vector<128x64xbf16>, vector<8x64xf32> -> vector<8x64xf32>
    %40 = vector.broadcast %23 : vector<1x64xf32> to vector<8x64xf32>
    %41 = arith.addf %39, %40 : vector<8x64xf32>
    %42 = arith.truncf %41 : vector<8x64xf32> to vector<8x64xbf16>
    %cst_31 = arith.constant dense<0.000000e+00> : vector<8x64xf32>
    %43 = tpu.matmul %42, %24, %cst_31 {dimension_numbers = #tpu.dot_dimension_numbers<[1], [0], [0], [1], [0, 0, 1, 1], [], []>} : vector<8x64xbf16>, vector<64x64xbf16>, vector<8x64xf32> -> vector<8x64xf32>
    %44 = vector.broadcast %25 : vector<1x64xf32> to vector<8x64xf32>
    %45 = arith.addf %43, %44 : vector<8x64xf32>
    %cst_32 = arith.constant 0.000000e+00 : f32
    %46 = vector.broadcast %cst_32 : f32 to vector<8x64xf32>
    %47 = arith.maximumf %45, %46 : vector<8x64xf32>
    %48 = arith.truncf %47 : vector<8x64xf32> to vector<8x64xbf16>
    %cst_33 = arith.constant dense<0.000000e+00> : vector<8x128xf32>
    %49 = tpu.matmul %48, %26, %cst_33 {dimension_numbers = #tpu.dot_dimension_numbers<[1], [0], [0], [1], [0, 0, 1, 1], [], []>} : vector<8x64xbf16>, vector<64x128xbf16>, vector<8x128xf32> -> vector<8x128xf32>
    %50 = vector.broadcast %27 : vector<1x128xf32> to vector<8x128xf32>
    %51 = arith.addf %49, %50 : vector<8x128xf32>
    %52 = vector.extract_strided_slice %51 {offsets = [0, 0], sizes = [8, 2], strides = [1, 1]} : vector<8x128xf32> to vector<8x2xf32>
    %c0_34 = arith.constant 0 : index
    %c0_35 = arith.constant 0 : index
    %53 = vector.load %arg14[%c0_34, %c0_35] : memref<8x2xf32, #tpu.memory_space<vmem>>, vector<8x2xf32>
    tpu.vector_store %arg14[%c0_34, %c0_35], %52 {strides = array<i32>} : memref<8x2xf32, #tpu.memory_space<vmem>>, vector<8x2xf32>,
    return
  }
  func.func @transform_0(%arg0: i32) -> (i32, i32) {
    %c0_i32 = arith.constant 0 : i32
    %c0_i32_0 = arith.constant 0 : i32
    return %arg0, %c0_i32 : i32, i32
  }
  func.func @transform_1(%arg0: i32) -> (i32, i32) {
    %c0_i32 = arith.constant 0 : i32
    %c0_i32_0 = arith.constant 0 : i32
    return %arg0, %c0_i32 : i32, i32
  }
  func.func @transform_2(%arg0: i32) -> (i32, i32) {
    %c0_i32 = arith.constant 0 : i32
    %c0_i32_0 = arith.constant 0 : i32
    %c0_i32_1 = arith.constant 0 : i32
    return %c0_i32, %c0_i32_0 : i32, i32
  }
  func.func @transform_3(%arg0: i32) -> (i32, i32) {
    %c0_i32 = arith.constant 0 : i32
    %c0_i32_0 = arith.constant 0 : i32
    %c0_i32_1 = arith.constant 0 : i32
    return %c0_i32, %c0_i32_0 : i32, i32
  }
  func.func @transform_4(%arg0: i32) -> (i32, i32) {
    %c0_i32 = arith.constant 0 : i32
    %c0_i32_0 = arith.constant 0 : i32
    %c0_i32_1 = arith.constant 0 : i32
    return %c0_i32, %c0_i32_0 : i32, i32
  }
  func.func @transform_5(%arg0: i32) -> (i32, i32) {
    %c0_i32 = arith.constant 0 : i32
    %c0_i32_0 = arith.constant 0 : i32
    %c0_i32_1 = arith.constant 0 : i32
    return %c0_i32, %c0_i32_0 : i32, i32
  }
  func.func @transform_6(%arg0: i32) -> (i32, i32) {
    %c0_i32 = arith.constant 0 : i32
    %c0_i32_0 = arith.constant 0 : i32
    %c0_i32_1 = arith.constant 0 : i32
    return %c0_i32, %c0_i32_0 : i32, i32
  }
  func.func @transform_7(%arg0: i32) -> (i32, i32) {
    %c0_i32 = arith.constant 0 : i32
    %c0_i32_0 = arith.constant 0 : i32
    %c0_i32_1 = arith.constant 0 : i32
    return %c0_i32, %c0_i32_0 : i32, i32
  }
  func.func @transform_8(%arg0: i32) -> (i32, i32) {
    %c0_i32 = arith.constant 0 : i32
    %c0_i32_0 = arith.constant 0 : i32
    %c0_i32_1 = arith.constant 0 : i32
    return %c0_i32, %c0_i32_0 : i32, i32
  }
  func.func @transform_9(%arg0: i32) -> (i32, i32) {
    %c0_i32 = arith.constant 0 : i32
    %c0_i32_0 = arith.constant 0 : i32
    %c0_i32_1 = arith.constant 0 : i32
    return %c0_i32, %c0_i32_0 : i32, i32
  }
  func.func @transform_10(%arg0: i32) -> (i32, i32) {
    %c0_i32 = arith.constant 0 : i32
    %c0_i32_0 = arith.constant 0 : i32
    %c0_i32_1 = arith.constant 0 : i32
    return %c0_i32, %c0_i32_0 : i32, i32
  }
  func.func @transform_11(%arg0: i32) -> (i32, i32) {
    %c0_i32 = arith.constant 0 : i32
    %c0_i32_0 = arith.constant 0 : i32
    %c0_i32_1 = arith.constant 0 : i32
    return %c0_i32, %c0_i32_0 : i32, i32
  }
  func.func @transform_12(%arg0: i32) -> (i32, i32) {
    %c0_i32 = arith.constant 0 : i32
    %c0_i32_0 = arith.constant 0 : i32
    %c0_i32_1 = arith.constant 0 : i32
    return %c0_i32, %c0_i32_0 : i32, i32
  }
  func.func @transform_13(%arg0: i32) -> (i32, i32) {
    %c0_i32 = arith.constant 0 : i32
    %c0_i32_0 = arith.constant 0 : i32
    return %arg0, %c0_i32 : i32, i32
  }
}

</mosaic_0001>

<llo_original>
// kernel: tpu_custom_call.1
$region0: #{tpu_custom_call.1}
  #allocation0 [shape = 'u32[]', space=smem, size = 0x4, offset = 0x4, fixed_abs, tag = 'smem constant byte address 0x4 - core index']
  #allocation1 [shape = 'u32[144,128]{1,0:T(1,128)}', space=vmem, size = 0x12000, scoped, tag = 'internal scratch']
  %s0 = inlined_call_operand.vmem [shape: s32[8,2], index: 0, kind: input, shape index: {}]
  %s1 = inlined_call_operand.vmem [shape: bf16[8,416], index: 1, kind: input, shape index: {}]
  %s2 = inlined_call_operand.vmem [shape: f32[16,192], index: 2, kind: input, shape index: {}]
  %s3 = inlined_call_operand.vmem [shape: f32[24,192], index: 3, kind: input, shape index: {}]
  %s4 = inlined_call_operand.vmem [shape: bf16[416,192], index: 4, kind: input, shape index: {}]
  %s5 = inlined_call_operand.vmem [shape: bf16[192,128], index: 5, kind: input, shape index: {}]
  %s6 = inlined_call_operand.vmem [shape: f32[1,128], index: 6, kind: input, shape index: {}]
  %s7 = inlined_call_operand.vmem [shape: bf16[128,64], index: 7, kind: input, shape index: {}]
  %s8 = inlined_call_operand.vmem [shape: f32[1,64], index: 8, kind: input, shape index: {}]
  %s9 = inlined_call_operand.vmem [shape: bf16[64,64], index: 9, kind: input, shape index: {}]
  %s10 = inlined_call_operand.vmem [shape: f32[1,64], index: 10, kind: input, shape index: {}]
  %s11 = inlined_call_operand.vmem [shape: bf16[64,128], index: 11, kind: input, shape index: {}]
  %s12 = inlined_call_operand.vmem [shape: f32[1,128], index: 12, kind: input, shape index: {}]
  %s13 = inlined_call_operand.vmem [shape: f32[8,2], index: 13, kind: output, shape index: {}]
  %s14 = sld [smem:[#allocation0]]
  $region62: #{tpu_custom_call.1} parent=0
    _
  %s16 = ssub.s32 1, %s14
  %s17 = scalar_select 0, %s16, %s14
  // Predicated region
  $region2: #{tpu_custom_call.1} parent=0 // pred_check
    _
  $region3: #{tpu_custom_call.1} parent=0 // pred_check_branch
    %19 = sbr.rel (0) target = $region5
  $region4: #{tpu_custom_call.1} parent=0 // pred_region
    _
  $region5: #{tpu_custom_call.1} parent=0 // pred_fallthru
    _
  // Predicated region
  $region6: #{tpu_custom_call.1} parent=0 // pred_check
    _
  $region7: #{tpu_custom_call.1} parent=0 // pred_check_branch
    %21 = sbr.rel (0) target = $region9
  $region8: #{tpu_custom_call.1} parent=0 // pred_region
    _
  $region9: #{tpu_custom_call.1} parent=0 // pred_fallthru
    _
  // Predicated region
  $region10: #{tpu_custom_call.1} parent=0 // pred_check
    _
  $region11: #{tpu_custom_call.1} parent=0 // pred_check_branch
    %23 = sbr.rel (0) target = $region13
  $region12: #{tpu_custom_call.1} parent=0 // pred_region
    _
  $region13: #{tpu_custom_call.1} parent=0 // pred_fallthru
    _
  // Predicated region
  $region14: #{tpu_custom_call.1} parent=0 // pred_check
    _
  $region15: #{tpu_custom_call.1} parent=0 // pred_check_branch
    %25 = sbr.rel (0) target = $region17
  $region16: #{tpu_custom_call.1} parent=0 // pred_region
    _
  $region17: #{tpu_custom_call.1} parent=0 // pred_fallthru
    _
  // Predicated region
  $region18: #{tpu_custom_call.1} parent=0 // pred_check
    _
  $region19: #{tpu_custom_call.1} parent=0 // pred_check_branch
    %27 = sbr.rel (0) target = $region21
  $region20: #{tpu_custom_call.1} parent=0 // pred_region
    _
  $region21: #{tpu_custom_call.1} parent=0 // pred_fallthru
    _
  // Predicated region
  $region22: #{tpu_custom_call.1} parent=0 // pred_check
    _
  $region23: #{tpu_custom_call.1} parent=0 // pred_check_branch
    %29 = sbr.rel (0) target = $region25
  $region24: #{tpu_custom_call.1} parent=0 // pred_region
    _
  $region25: #{tpu_custom_call.1} parent=0 // pred_fallthru
    _
  // Predicated region
  $region26: #{tpu_custom_call.1} parent=0 // pred_check
    _
  $region27: #{tpu_custom_call.1} parent=0 // pred_check_branch
    %31 = sbr.rel (0) target = $region29
  $region28: #{tpu_custom_call.1} parent=0 // pred_region
    _
  $region29: #{tpu_custom_call.1} parent=0 // pred_fallthru
    _
  // Predicated region
  $region30: #{tpu_custom_call.1} parent=0 // pred_check
    _
  $region31: #{tpu_custom_call.1} parent=0 // pred_check_branch
    %33 = sbr.rel (0) target = $region33
  $region32: #{tpu_custom_call.1} parent=0 // pred_region
    _
  $region33: #{tpu_custom_call.1} parent=0 // pred_fallthru
    _
  // Predicated region
  $region34: #{tpu_custom_call.1} parent=0 // pred_check
    _
  $region35: #{tpu_custom_call.1} parent=0 // pred_check_branch
    %35 = sbr.rel (0) target = $region37
  $region36: #{tpu_custom_call.1} parent=0 // pred_region
    _
  $region37: #{tpu_custom_call.1} parent=0 // pred_fallthru
    _
  // Predicated region
  $region38: #{tpu_custom_call.1} parent=0 // pred_check
    _
  $region39: #{tpu_custom_call.1} parent=0 // pred_check_branch
    %37 = sbr.rel (0) target = $region41
  $region40: #{tpu_custom_call.1} parent=0 // pred_region
    _
  $region41: #{tpu_custom_call.1} parent=0 // pred_fallthru
    _
  // Predicated region
  $region42: #{tpu_custom_call.1} parent=0 // pred_check
    _
  $region43: #{tpu_custom_call.1} parent=0 // pred_check_branch
    %39 = sbr.rel (0) target = $region45
  $region44: #{tpu_custom_call.1} parent=0 // pred_region
    _
  $region45: #{tpu_custom_call.1} parent=0 // pred_fallthru
    _
  // Predicated region
  $region46: #{tpu_custom_call.1} parent=0 // pred_check
    _
  $region47: #{tpu_custom_call.1} parent=0 // pred_check_branch
    %41 = sbr.rel (0) target = $region49
  $region48: #{tpu_custom_call.1} parent=0 // pred_region
    _
  $region49: #{tpu_custom_call.1} parent=0 // pred_fallthru
    _
  // Predicated region
  $region50: #{tpu_custom_call.1} parent=0 // pred_check
    _
  $region51: #{tpu_custom_call.1} parent=0 // pred_check_branch
    %43 = sbr.rel (0) target = $region53
  $region52: #{tpu_custom_call.1} parent=0 // pred_region
    _
  $region53: #{tpu_custom_call.1} parent=0 // pred_fallthru
    _
  %v45 = vld [vmem:[%s0] sm:$0xff]
  %v46 = vlaneseq
  %v47 = vand.u32 %v46, 127
  %48 = vset.pattern.permute.xlu0 0
  %49 = vperm.xlu0 %48, %v45
  %v50 = vpop.permute.xlu0 %49
  %vm51 = vcmp.eq.s32.totalorder %v50, %v47
  %v52 = vsel %vm51, 1, 0
  %v53 = vcvt.s32.f32 %v52
  %54 = vset.pattern.permute.xlu0 1
  %55 = vperm.xlu0 %54, %v45
  %v56 = vpop.permute.xlu0 %55
  %vm57 = vcmp.eq.s32.totalorder %v56, %v47
  %v58 = vsel %vm57, 1, 0
  %v59 = vcvt.s32.f32 %v58
  %v60 = vld [vmem:[%s2] sm:$0xff]
  %v61 = vld [vmem:[%s2 + $0x8] sm:$0xff]
  %v62 = vld [vmem:[%s2 + $0x10] sm:$0xff]
  %v63 = vld [vmem:[%s2 + $0x18] sm:$0xff]
  %v64 = vld [vmem:[%s3] sm:$0xff]
  %v65 = vld [vmem:[%s3 + $0x8] sm:$0xff]
  %v66 = vld [vmem:[%s3 + $0x10] sm:$0xff]
  %v67 = vld [vmem:[%s3 + $0x18] sm:$0xff]
  %v68 = vld [vmem:[%s3 + $0x20] sm:$0xff]
  %v69 = vld [vmem:[%s3 + $0x28] sm:$0xff]
  %vm70 = vcmask 195584
  %v72 = vsel %vm70, %v59, 0
  %74 = vmatprep.subr.mxu0 %v65
  %75 = vmatpush1.msra.mxu0 %v64
  %76 = vmatprep.subr.mxu0 %v67
  %77 = vmatpush1.msra.mxu0 %v66
  %78 = vmatprep.subr.mxu0 %v69
  %79 = vmatpush1.msra.mxu0 %v68
  %80 = vmatprep.subr.mxu0 0.0
  %81 = vmatpush1.msra.mxu0 0.0
  %82 = vmatprep.subr.mxu0 0.0
  %83 = vmatpush1.msra.mxu0 0.0
  %84 = vmatprep.subr.mxu0 0.0
  %85 = vmatpush1.msra.mxu0 0.0
  %86 = vmatprep.subr.mxu0 0.0
  %87 = vmatpush1.msra.mxu0 0.0
  %88 = vmatprep.subr.mxu0 0.0
  %89 = vmatpush1.msra.mxu0 0.0
  %90 = vmatprep.subr.mxu0 0.0
  %91 = vmatpush1.msra.mxu0 0.0
  %92 = vmatprep.subr.mxu0 0.0
  %93 = vmatpush1.msra.mxu0 0.0
  %94 = vmatprep.subr.mxu0 0.0
  %95 = vmatpush1.msra.mxu0 0.0
  %96 = vmatprep.subr.mxu0 0.0
  %97 = vmatpush1.msra.mxu0 0.0
  %98 = vmatprep.subr.mxu0 0.0
  %99 = vmatpush1.msra.mxu0 0.0
  %100 = vmatprep.subr.mxu0 0.0
  %101 = vmatpush1.msra.mxu0 0.0
  %102 = vmatprep.subr.mxu0 0.0
  %103 = vmatpush1.msra.mxu0 0.0
  %104 = vmatprep.subr.mxu0 0.0
  %105 = vmatpush1.msra.mxu0 0.0
  %106 = vmatprep.subr.mxu0 0.0
  %107 = vmatpush1.msra.mxu0 0.0
  %108 = vmatprep.subr.mxu0 0.0
  %109 = vmatpush1.msra.mxu0 0.0
  %110 = vmatprep.subr.mxu0 0.0
  %111 = vmatpush1.msra.mxu0 0.0
  %112 = vmatprep.subr.mxu0 0.0
  %113 = vmatpush1.msra.mxu0 0.0
  %114 = vmatprep.subr.mxu0 0.0
  %115 = vmatpush1.msra.mxu0 0.0
  %116 = vmatprep.subr.mxu0 0.0
  %117 = vmatpush1.msra.mxu0 0.0
  %118 = vmatprep.subr.mxu0 0.0
  %119 = vmatpush1.msra.mxu0 0.0
  %120 = vmatprep.subr.mxu0 0.0
  %121 = vmatpush1.msra.mxu0 0.0
  %122 = vmatprep.subr.mxu0 0.0
  %123 = vmatpush1.msra.mxu0 0.0
  %124 = vmatprep.subr.mxu0 0.0
  %125 = vmatpush1.msra.mxu0 0.0
  %126 = vmatprep.subr.mxu0 0.0
  %127 = vmatpush1.msra.mxu0 0.0
  %128 = vmatprep.subr.mxu0 0.0
  %129 = vmatpush1.msra.mxu0 0.0
  %130 = vmatprep.subr.mxu0 0.0
  %131 = vmatpush1.msra.mxu0 0.0
  %132 = vmatprep.subr.mxu0 0.0
  %133 = vmatpush1.msra.mxu0 0.0
  %134 = vmatprep.subr.mxu0 0.0
  %135 = vmatpush1.msra.mxu0 0.0
  %136 = vmatprep.subr.mxu0 0.0
  %137 = vmatpush1.msra.mxu0 0.0
  %138 = vmatprep.mubr.f32.mxu0 0.0
  %139 = vmatmul.mubr.f32.gmra.mrb[0].mxu0 %v72
  %v140 = vpop.f32.mrb[0].mxu0
  %v141 = vadd.f32 0.0, %v140
  %v142 = vpop.f32.mrb[0].mxu0
  %v143 = vadd.f32 0.0, %v142
  %144 = vdwg.mxu0
  %vm145 = vcmask 130048
  %v147 = vsel %vm145, %v53, 0
  %149 = vmatprep.subr.mxu0 %v61
  %150 = vmatpush1.msra.mxu0 %v60
  %151 = vmatprep.subr.mxu0 %v63
  %152 = vmatpush1.msra.mxu0 %v62
  %153 = vmatprep.subr.mxu0 0.0
  %154 = vmatpush1.msra.mxu0 0.0
  %155 = vmatprep.subr.mxu0 0.0
  %156 = vmatpush1.msra.mxu0 0.0
  %157 = vmatprep.subr.mxu0 0.0
  %158 = vmatpush1.msra.mxu0 0.0
  %159 = vmatprep.subr.mxu0 0.0
  %160 = vmatpush1.msra.mxu0 0.0
  %161 = vmatprep.subr.mxu0 0.0
  %162 = vmatpush1.msra.mxu0 0.0
  %163 = vmatprep.subr.mxu0 0.0
  %164 = vmatpush1.msra.mxu0 0.0
  %165 = vmatprep.subr.mxu0 0.0
  %166 = vmatpush1.msra.mxu0 0.0
  %167 = vmatprep.subr.mxu0 0.0
  %168 = vmatpush1.msra.mxu0 0.0
  %169 = vmatprep.subr.mxu0 0.0
  %170 = vmatpush1.msra.mxu0 0.0
  %171 = vmatprep.subr.mxu0 0.0
  %172 = vmatpush1.msra.mxu0 0.0
  %173 = vmatprep.subr.mxu0 0.0
  %174 = vmatpush1.msra.mxu0 0.0
  %175 = vmatprep.subr.mxu0 0.0
  %176 = vmatpush1.msra.mxu0 0.0
  %177 = vmatprep.subr.mxu0 0.0
  %178 = vmatpush1.msra.mxu0 0.0
  %179 = vmatprep.subr.mxu0 0.0
  %180 = vmatpush1.msra.mxu0 0.0
  %181 = vmatprep.subr.mxu0 0.0
  %182 = vmatpush1.msra.mxu0 0.0
  %183 = vmatprep.subr.mxu0 0.0
  %184 = vmatpush1.msra.mxu0 0.0
  %185 = vmatprep.subr.mxu0 0.0
  %186 = vmatpush1.msra.mxu0 0.0
  %187 = vmatprep.subr.mxu0 0.0
  %188 = vmatpush1.msra.mxu0 0.0
  %189 = vmatprep.subr.mxu0 0.0
  %190 = vmatpush1.msra.mxu0 0.0
  %191 = vmatprep.subr.mxu0 0.0
  %192 = vmatpush1.msra.mxu0 0.0
  %193 = vmatprep.subr.mxu0 0.0
  %194 = vmatpush1.msra.mxu0 0.0
  %195 = vmatprep.subr.mxu0 0.0
  %196 = vmatpush1.msra.mxu0 0.0
  %197 = vmatprep.subr.mxu0 0.0
  %198 = vmatpush1.msra.mxu0 0.0
  %199 = vmatprep.subr.mxu0 0.0
  %200 = vmatpush1.msra.mxu0 0.0
  %201 = vmatprep.subr.mxu0 0.0
  %202 = vmatpush1.msra.mxu0 0.0
  %203 = vmatprep.subr.mxu0 0.0
  %204 = vmatpush1.msra.mxu0 0.0
  %205 = vmatprep.subr.mxu0 0.0
  %206 = vmatpush1.msra.mxu0 0.0
  %207 = vmatprep.subr.mxu0 0.0
  %208 = vmatpush1.msra.mxu0 0.0
  %209 = vmatprep.subr.mxu0 0.0
  %210 = vmatpush1.msra.mxu0 0.0
  %211 = vmatprep.subr.mxu0 0.0
  %212 = vmatpush1.msra.mxu0 0.0
  %213 = vmatprep.mubr.f32.mxu0 0.0
  %214 = vmatmul.mubr.f32.gmra.mrb[0].mxu0 %v147
  %v215 = vpop.f32.mrb[0].mxu0
  %v216 = vadd.f32 %v141, %v215
  %v217 = vpop.f32.mrb[0].mxu0
  %v218 = vadd.f32 %v143, %v217
  %219 = vdwg.mxu0
  %v220 = vld [vmem:[%s1] sm:$0xff]
  %v221 = vld [vmem:[%s1 + $0x8] sm:$0xff]
  %v222 = vld [vmem:[%s4] sm:$0xff]
  %v223 = vld [vmem:[%s4 + $0x8] sm:$0xff]
  %v224 = vld [vmem:[%s4 + $0x10] sm:$0xff]
  %v225 = vld [vmem:[%s4 + $0x18] sm:$0xff]
  %v226 = vld [vmem:[%s4 + $0x20] sm:$0xff]
  %v227 = vld [vmem:[%s4 + $0x28] sm:$0xff]
  %v228 = vld [vmem:[%s4 + $0x30] sm:$0xff]
  %v229 = vld [vmem:[%s4 + $0x38] sm:$0xff]
  %v230 = vld [vmem:[%s4 + $0x40] sm:$0xff]
  %v231 = vld [vmem:[%s4 + $0x48] sm:$0xff]
  %v232 = vld [vmem:[%s4 + $0x50] sm:$0xff]
  %v233 = vld [vmem:[%s4 + $0x58] sm:$0xff]
  %v234 = vld [vmem:[%s4 + $0x60] sm:$0xff]
  %v235 = vld [vmem:[%s4 + $0x68] sm:$0xff]
  %v236 = vld [vmem:[%s4 + $0x70] sm:$0xff]
  %v237 = vld [vmem:[%s4 + $0x78] sm:$0xff]
  %v238 = vld [vmem:[%s4 + $0x80] sm:$0xff]
  %v239 = vld [vmem:[%s4 + $0x88] sm:$0xff]
  %v240 = vld [vmem:[%s4 + $0x90] sm:$0xff]
  %v241 = vld [vmem:[%s4 + $0x98] sm:$0xff]
  %v242 = vld [vmem:[%s4 + $0xa0] sm:$0xff]
  %v243 = vld [vmem:[%s4 + $0xa8] sm:$0xff]
  %v244 = vld [vmem:[%s4 + $0xb0] sm:$0xff]
  %v245 = vld [vmem:[%s4 + $0xb8] sm:$0xff]
  %v246 = vld [vmem:[%s4 + $0xc0] sm:$0xff]
  %v247 = vld [vmem:[%s4 + $0xc8] sm:$0xff]
  %v248 = vld [vmem:[%s4 + $0xd0] sm:$0xff]
  %v249 = vld [vmem:[%s4 + $0xd8] sm:$0xff]
  %v250 = vld [vmem:[%s4 + $0xe0] sm:$0xff]
  %v251 = vld [vmem:[%s4 + $0xe8] sm:$0xff]
  %v252 = vld [vmem:[%s4 + $0xf0] sm:$0xff]
  %v253 = vld [vmem:[%s4 + $0xf8] sm:$0xff]
  %v254 = vld [vmem:[%s4 + $0x100] sm:$0xff]
  %v255 = vld [vmem:[%s4 + $0x108] sm:$0xff]
  %v256 = vld [vmem:[%s4 + $0x110] sm:$0xff]
  %v257 = vld [vmem:[%s4 + $0x118] sm:$0xff]
  %v258 = vld [vmem:[%s4 + $0x120] sm:$0xff]
  %v259 = vld [vmem:[%s4 + $0x128] sm:$0xff]
  %v260 = vld [vmem:[%s4 + $0x130] sm:$0xff]
  %v261 = vld [vmem:[%s4 + $0x138] sm:$0xff]
  %v262 = vld [vmem:[%s4 + $0x140] sm:$0xff]
  %v263 = vld [vmem:[%s4 + $0x148] sm:$0xff]
  %v264 = vld [vmem:[%s4 + $0x150] sm:$0xff]
  %v265 = vld [vmem:[%s4 + $0x158] sm:$0xff]
  %v266 = vld [vmem:[%s4 + $0x160] sm:$0xff]
  %v267 = vld [vmem:[%s4 + $0x168] sm:$0xff]
  %v268 = vld [vmem:[%s4 + $0x170] sm:$0xff]
  %v269 = vld [vmem:[%s4 + $0x178] sm:$0xff]
  %v270 = vld [vmem:[%s4 + $0x180] sm:$0xff]
  %v271 = vld [vmem:[%s4 + $0x188] sm:$0xff]
  %v272 = vld [vmem:[%s4 + $0x190] sm:$0xff]
  %v273 = vld [vmem:[%s4 + $0x198] sm:$0xff]
  %v274 = vld [vmem:[%s5] sm:$0xf]
  %v275 = vld [vmem:[%s5 + $0x4] sm:$0xf]
  %v276 = vld [vmem:[%s5 + $0x8] sm:$0xf]
  %v277 = vld [vmem:[%s5 + $0xc] sm:$0xf]
  %v278 = vld [vmem:[%s5 + $0x10] sm:$0xf]
  %v279 = vld [vmem:[%s5 + $0x14] sm:$0xf]
  %v280 = vld [vmem:[%s5 + $0x18] sm:$0xf]
  %v281 = vld [vmem:[%s5 + $0x1c] sm:$0xf]
  %v282 = vld [vmem:[%s5 + $0x20] sm:$0xf]
  %v283 = vld [vmem:[%s5 + $0x24] sm:$0xf]
  %v284 = vld [vmem:[%s5 + $0x28] sm:$0xf]
  %v285 = vld [vmem:[%s5 + $0x2c] sm:$0xf]
  %v286 = vld [vmem:[%s5 + $0x30] sm:$0xf]
  %v287 = vld [vmem:[%s5 + $0x34] sm:$0xf]
  %v288 = vld [vmem:[%s5 + $0x38] sm:$0xf]
  %v289 = vld [vmem:[%s5 + $0x3c] sm:$0xf]
  %v290 = vld [vmem:[%s5 + $0x40] sm:$0xf]
  %v291 = vld [vmem:[%s5 + $0x44] sm:$0xf]
  %v292 = vld [vmem:[%s5 + $0x48] sm:$0xf]
  %v293 = vld [vmem:[%s5 + $0x4c] sm:$0xf]
  %v294 = vld [vmem:[%s5 + $0x50] sm:$0xf]
  %v295 = vld [vmem:[%s5 + $0x54] sm:$0xf]
  %v296 = vld [vmem:[%s5 + $0x58] sm:$0xf]
  %v297 = vld [vmem:[%s5 + $0x5c] sm:$0xf]
  %v298 = vld [vmem:[%s6] sm:$0x1]
  %v299 = vld [vmem:[%s7] sm:$0xf]
  %v300 = vld [vmem:[%s7 + $0x4] sm:$0xf]
  %v301 = vld [vmem:[%s7 + $0x8] sm:$0xf]
  %v302 = vld [vmem:[%s7 + $0xc] sm:$0xf]
  %v303 = vld [vmem:[%s7 + $0x10] sm:$0xf]
  %v304 = vld [vmem:[%s7 + $0x14] sm:$0xf]
  %v305 = vld [vmem:[%s7 + $0x18] sm:$0xf]
  %v306 = vld [vmem:[%s7 + $0x1c] sm:$0xf]
  %v307 = vld [vmem:[%s7 + $0x20] sm:$0xf]
  %v308 = vld [vmem:[%s7 + $0x24] sm:$0xf]
  %v309 = vld [vmem:[%s7 + $0x28] sm:$0xf]
  %v310 = vld [vmem:[%s7 + $0x2c] sm:$0xf]
  %v311 = vld [vmem:[%s7 + $0x30] sm:$0xf]
  %v312 = vld [vmem:[%s7 + $0x34] sm:$0xf]
  %v313 = vld [vmem:[%s7 + $0x38] sm:$0xf]
  %v314 = vld [vmem:[%s7 + $0x3c] sm:$0xf]
  %v315 = vld [vmem:[%s8] sm:$0x1]
  %v316 = vld [vmem:[%s9] sm:$0xf]
  %v317 = vld [vmem:[%s9 + $0x4] sm:$0xf]
  %v318 = vld [vmem:[%s9 + $0x8] sm:$0xf]
  %v319 = vld [vmem:[%s9 + $0xc] sm:$0xf]
  %v320 = vld [vmem:[%s9 + $0x10] sm:$0xf]
  %v321 = vld [vmem:[%s9 + $0x14] sm:$0xf]
  %v322 = vld [vmem:[%s9 + $0x18] sm:$0xf]
  %v323 = vld [vmem:[%s9 + $0x1c] sm:$0xf]
  %v324 = vld [vmem:[%s10] sm:$0x1]
  %v325 = vld [vmem:[%s11] sm:$0xf]
  %v326 = vld [vmem:[%s11 + $0x4] sm:$0xf]
  %v327 = vld [vmem:[%s11 + $0x8] sm:$0xf]
  %v328 = vld [vmem:[%s11 + $0xc] sm:$0xf]
  %v329 = vld [vmem:[%s11 + $0x10] sm:$0xf]
  %v330 = vld [vmem:[%s11 + $0x14] sm:$0xf]
  %v331 = vld [vmem:[%s11 + $0x18] sm:$0xf]
  %v332 = vld [vmem:[%s11 + $0x1c] sm:$0xf]
  %v333 = vld [vmem:[%s12] sm:$0x1]
  %v336 = vunpack.c.l.b16 %v220
  %v337 = vunpack.c.h.b16 %v220
  %v338 = vunpack.c.l.b16 %v221
  %v339 = vunpack.c.h.b16 %v221
  %v340 = vpack.c.b16 %v336, %v336
  %v341 = vpack.c.b16 %v337, %v337
  %v342 = vpack.c.b16 %v338, %v338
  %v343 = vpack.c.b16 %v339, %v339
  %v399 = vunpack.c.l.b16 %v222
  %v400 = vunpack.c.h.b16 %v222
  %v401 = vunpack.c.l.b16 %v223
  %v402 = vunpack.c.h.b16 %v223
  %v403 = vunpack.c.l.b16 %v224
  %v404 = vunpack.c.h.b16 %v224
  %v405 = vunpack.c.l.b16 %v225
  %v406 = vunpack.c.h.b16 %v225
  %v407 = vunpack.c.l.b16 %v226
  %v408 = vunpack.c.h.b16 %v226
  %v409 = vunpack.c.l.b16 %v227
  %v410 = vunpack.c.h.b16 %v227
  %v411 = vunpack.c.l.b16 %v228
  %v412 = vunpack.c.h.b16 %v228
  %v413 = vunpack.c.l.b16 %v229
  %v414 = vunpack.c.h.b16 %v229
  %v415 = vunpack.c.l.b16 %v230
  %v416 = vunpack.c.h.b16 %v230
  %v417 = vunpack.c.l.b16 %v231
  %v418 = vunpack.c.h.b16 %v231
  %v419 = vunpack.c.l.b16 %v232
  %v420 = vunpack.c.h.b16 %v232
  %v421 = vunpack.c.l.b16 %v233
  %v422 = vunpack.c.h.b16 %v233
  %v423 = vunpack.c.l.b16 %v234
  %v424 = vunpack.c.h.b16 %v234
  %v425 = vunpack.c.l.b16 %v235
  %v426 = vunpack.c.h.b16 %v235
  %v427 = vunpack.c.l.b16 %v236
  %v428 = vunpack.c.h.b16 %v236
  %v429 = vunpack.c.l.b16 %v237
  %v430 = vunpack.c.h.b16 %v237
  %v431 = vunpack.c.l.b16 %v238
  %v432 = vunpack.c.h.b16 %v238
  %v433 = vunpack.c.l.b16 %v239
  %v434 = vunpack.c.h.b16 %v239
  %v435 = vunpack.c.l.b16 %v240
  %v436 = vunpack.c.h.b16 %v240
  %v437 = vunpack.c.l.b16 %v241
  %v438 = vunpack.c.h.b16 %v241
  %v439 = vunpack.c.l.b16 %v242
  %v440 = vunpack.c.h.b16 %v242
  %v441 = vunpack.c.l.b16 %v243
  %v442 = vunpack.c.h.b16 %v243
  %v443 = vunpack.c.l.b16 %v244
  %v444 = vunpack.c.h.b16 %v244
  %v445 = vunpack.c.l.b16 %v245
  %v446 = vunpack.c.h.b16 %v245
  %v447 = vunpack.c.l.b16 %v246
  %v448 = vunpack.c.h.b16 %v246
  %v449 = vunpack.c.l.b16 %v247
  %v450 = vunpack.c.h.b16 %v247
  %v451 = vunpack.c.l.b16 %v248
  %v452 = vunpack.c.h.b16 %v248
  %v453 = vunpack.c.l.b16 %v249
  %v454 = vunpack.c.h.b16 %v249
  %v455 = vunpack.c.l.b16 %v250
  %v456 = vunpack.c.h.b16 %v250
  %v457 = vunpack.c.l.b16 %v251
  %v458 = vunpack.c.h.b16 %v251
  %v459 = vunpack.c.l.b16 %v252
  %v460 = vunpack.c.h.b16 %v252
  %v461 = vunpack.c.l.b16 %v253
  %v462 = vunpack.c.h.b16 %v253
  %v463 = vunpack.c.l.b16 %v254
  %v464 = vunpack.c.h.b16 %v254
  %v465 = vunpack.c.l.b16 %v255
  %v466 = vunpack.c.h.b16 %v255
  %v467 = vunpack.c.l.b16 %v256
  %v468 = vunpack.c.h.b16 %v256
  %v469 = vunpack.c.l.b16 %v257
  %v470 = vunpack.c.h.b16 %v257
  %v471 = vunpack.c.l.b16 %v258
  %v472 = vunpack.c.h.b16 %v258
  %v473 = vunpack.c.l.b16 %v259
  %v474 = vunpack.c.h.b16 %v259
  %v475 = vunpack.c.l.b16 %v260
  %v476 = vunpack.c.h.b16 %v260
  %v477 = vunpack.c.l.b16 %v261
  %v478 = vunpack.c.h.b16 %v261
  %v479 = vunpack.c.l.b16 %v262
  %v480 = vunpack.c.h.b16 %v262
  %v481 = vunpack.c.l.b16 %v263
  %v482 = vunpack.c.h.b16 %v263
  %v483 = vunpack.c.l.b16 %v264
  %v484 = vunpack.c.h.b16 %v264
  %v485 = vunpack.c.l.b16 %v265
  %v486 = vunpack.c.h.b16 %v265
  %v487 = vunpack.c.l.b16 %v266
  %v488 = vunpack.c.h.b16 %v266
  %v489 = vunpack.c.l.b16 %v267
  %v490 = vunpack.c.h.b16 %v267
  %v491 = vunpack.c.l.b16 %v268
  %v492 = vunpack.c.h.b16 %v268
  %v493 = vunpack.c.l.b16 %v269
  %v494 = vunpack.c.h.b16 %v269
  %v495 = vunpack.c.l.b16 %v270
  %v496 = vunpack.c.h.b16 %v270
  %v497 = vunpack.c.l.b16 %v271
  %v498 = vunpack.c.h.b16 %v271
  %v499 = vunpack.c.l.b16 %v272
  %v500 = vunpack.c.h.b16 %v272
  %v501 = vunpack.c.l.b16 %v273
  %v502 = vunpack.c.h.b16 %v273
  %v503 = vpack.c.b16 %v401, %v399
  %v504 = vpack.c.b16 %v402, %v400
  %v505 = vpack.c.b16 %v405, %v403
  %v506 = vpack.c.b16 %v406, %v404
  %v507 = vpack.c.b16 %v409, %v407
  %v508 = vpack.c.b16 %v410, %v408
  %v509 = vpack.c.b16 %v413, %v411
  %v510 = vpack.c.b16 %v414, %v412
  %v511 = vpack.c.b16 %v417, %v415
  %v512 = vpack.c.b16 %v418, %v416
  %v513 = vpack.c.b16 %v421, %v419
  %v514 = vpack.c.b16 %v422, %v420
  %v515 = vpack.c.b16 %v425, %v423
  %v516 = vpack.c.b16 %v426, %v424
  %v517 = vpack.c.b16 %v429, %v427
  %v518 = vpack.c.b16 %v430, %v428
  %v519 = vpack.c.b16 %v433, %v431
  %v520 = vpack.c.b16 %v434, %v432
  %v521 = vpack.c.b16 %v437, %v435
  %v522 = vpack.c.b16 %v438, %v436
  %v523 = vpack.c.b16 %v441, %v439
  %v524 = vpack.c.b16 %v442, %v440
  %v525 = vpack.c.b16 %v445, %v443
  %v526 = vpack.c.b16 %v446, %v444
  %v527 = vpack.c.b16 %v449, %v447
  %v528 = vpack.c.b16 %v450, %v448
  %v529 = vpack.c.b16 %v453, %v451
  %v530 = vpack.c.b16 %v454, %v452
  %v531 = vpack.c.b16 %v457, %v455
  %v532 = vpack.c.b16 %v458, %v456
  %v533 = vpack.c.b16 %v461, %v459
  %v534 = vpack.c.b16 %v462, %v460
  %v535 = vpack.c.b16 %v465, %v463
  %v536 = vpack.c.b16 %v466, %v464
  %v537 = vpack.c.b16 %v469, %v467
  %v538 = vpack.c.b16 %v470, %v468
  %v539 = vpack.c.b16 %v473, %v471
  %v540 = vpack.c.b16 %v474, %v472
  %v541 = vpack.c.b16 %v477, %v475
  %v542 = vpack.c.b16 %v478, %v476
  %v543 = vpack.c.b16 %v481, %v479
  %v544 = vpack.c.b16 %v482, %v480
  %v545 = vpack.c.b16 %v485, %v483
  %v546 = vpack.c.b16 %v486, %v484
  %v547 = vpack.c.b16 %v489, %v487
  %v548 = vpack.c.b16 %v490, %v488
  %v549 = vpack.c.b16 %v493, %v491
  %v550 = vpack.c.b16 %v494, %v492
  %v551 = vpack.c.b16 %v497, %v495
  %v552 = vpack.c.b16 %v498, %v496
  %v553 = vpack.c.b16 %v501, %v499
  %v554 = vpack.c.b16 %v502, %v500
  %vm607 = vcmask 261120
  %v609 = vsel %vm607, %v343, 0
  %611 = vmatprep.subr.bf16.mxu0 %v504
  %612 = vmatpush1.bf16.msra.mxu0 %v503
  %613 = vmatprep.subr.bf16.mxu0 %v506
  %614 = vmatpush1.bf16.msra.mxu0 %v505
  %615 = vmatprep.subr.bf16.mxu0 %v508
  %616 = vmatpush1.bf16.msra.mxu0 %v507
  %617 = vmatprep.subr.bf16.mxu0 %v510
  %618 = vmatpush1.bf16.msra.mxu0 %v509
  %619 = vmatprep.subr.bf16.mxu0 %v512
  %620 = vmatpush1.bf16.msra.mxu0 %v511
  %621 = vmatprep.subr.bf16.mxu0 %v514
  %622 = vmatpush1.bf16.msra.mxu0 %v513
  %623 = vmatprep.subr.bf16.mxu0 %v516
  %624 = vmatpush1.bf16.msra.mxu0 %v515
  %625 = vmatprep.subr.bf16.mxu0 %v518
  %626 = vmatpush1.bf16.msra.mxu0 %v517
  %627 = vmatprep.subr.bf16.mxu0 %v520
  %628 = vmatpush1.bf16.msra.mxu0 %v519
  %629 = vmatprep.subr.bf16.mxu0 %v522
  %630 = vmatpush1.bf16.msra.mxu0 %v521
  %631 = vmatprep.subr.bf16.mxu0 %v524
  %632 = vmatpush1.bf16.msra.mxu0 %v523
  %633 = vmatprep.subr.bf16.mxu0 %v526
  %634 = vmatpush1.bf16.msra.mxu0 %v525
  %635 = vmatprep.subr.bf16.mxu0 %v528
  %636 = vmatpush1.bf16.msra.mxu0 %v527
  %637 = vmatprep.subr.bf16.mxu0 %v530
  %638 = vmatpush1.bf16.msra.mxu0 %v529
  %639 = vmatprep.subr.bf16.mxu0 %v532
  %640 = vmatpush1.bf16.msra.mxu0 %v531
  %641 = vmatprep.subr.bf16.mxu0 %v534
  %642 = vmatpush1.bf16.msra.mxu0 %v533
  %643 = vmatprep.mubr.bf16.mxu0 %v341
  %644 = vmatmul.mubr.bf16.gmra.mrb[0].mxu0 %v340
  %v645 = vpop.f32.mrb[0].mxu0
  %v646 = vadd.f32 %v216, %v645
  %v647 = vpop.f32.mrb[0].mxu0
  %v648 = vadd.f32 %v218, %v647
  %v649 = vpop.f32.mrb[0].mxu0
  %v650 = vpop.f32.mrb[0].mxu0
  %651 = vdwg.mxu0
  %652 = vmatprep.subr.bf16.mxu0 %v536
  %653 = vmatpush1.bf16.msra.mxu0 %v535
  %654 = vmatprep.subr.bf16.mxu0 %v538
  %655 = vmatpush1.bf16.msra.mxu0 %v537
  %656 = vmatprep.subr.bf16.mxu0 %v540
  %657 = vmatpush1.bf16.msra.mxu0 %v539
  %658 = vmatprep.subr.bf16.mxu0 %v542
  %659 = vmatpush1.bf16.msra.mxu0 %v541
  %660 = vmatprep.subr.bf16.mxu0 %v544
  %661 = vmatpush1.bf16.msra.mxu0 %v543
  %662 = vmatprep.subr.bf16.mxu0 %v546
  %663 = vmatpush1.bf16.msra.mxu0 %v545
  %664 = vmatprep.subr.bf16.mxu0 %v548
  %665 = vmatpush1.bf16.msra.mxu0 %v547
  %666 = vmatprep.subr.bf16.mxu0 %v550
  %667 = vmatpush1.bf16.msra.mxu0 %v549
  %668 = vmatprep.subr.bf16.mxu0 %v552
  %669 = vmatpush1.bf16.msra.mxu0 %v551
  %670 = vmatprep.subr.bf16.mxu0 %v554
  %671 = vmatpush1.bf16.msra.mxu0 %v553
  %672 = vmatprep.subr.bf16.mxu0 0
  %673 = vmatpush1.bf16.msra.mxu0 0
  %674 = vmatprep.subr.bf16.mxu0 0
  %675 = vmatpush1.bf16.msra.mxu0 0
  %676 = vmatprep.subr.bf16.mxu0 0
  %677 = vmatpush1.bf16.msra.mxu0 0
  %678 = vmatprep.subr.bf16.mxu0 0
  %679 = vmatpush1.bf16.msra.mxu0 0
  %680 = vmatprep.subr.bf16.mxu0 0
  %681 = vmatpush1.bf16.msra.mxu0 0
  %682 = vmatprep.subr.bf16.mxu0 0
  %683 = vmatpush1.bf16.msra.mxu0 0
  %684 = vmatprep.mubr.bf16.mxu0 %v609
  %685 = vmatmul.mubr.bf16.gmra.mrb[0].mxu0 %v342
  %v686 = vpop.f32.mrb[0].mxu0
  %v687 = vadd.f32 %v646, %v686
  %v688 = vpop.f32.mrb[0].mxu0
  %v689 = vadd.f32 %v648, %v688
  %v690 = vpop.f32.mrb[0].mxu0
  %v691 = vpop.f32.mrb[0].mxu0
  %692 = vdwg.mxu0
  %v693 = vmax.f32 %v687, 0.0
  %v694 = vmax.f32 %v689, 0.0
  %v695 = vpack.c.bf16 %v693, %v693
  %v696 = vpack.c.bf16 %v694, %v694
  %v698 = vlaneseq
  %v699 = vshrl.u32 %v698, 7
  %v700 = vsub.s32 0, %v699
  %v701 = vrot.slane %v298, %v700
  %v727 = vunpack.c.l.b16 %v274
  %v728 = vunpack.c.l.b16 %v275
  %v729 = vunpack.c.l.b16 %v276
  %v730 = vunpack.c.l.b16 %v277
  %v731 = vunpack.c.l.b16 %v278
  %v732 = vunpack.c.l.b16 %v279
  %v733 = vunpack.c.l.b16 %v280
  %v734 = vunpack.c.l.b16 %v281
  %v735 = vunpack.c.l.b16 %v282
  %v736 = vunpack.c.l.b16 %v283
  %v737 = vunpack.c.l.b16 %v284
  %v738 = vunpack.c.l.b16 %v285
  %v739 = vunpack.c.l.b16 %v286
  %v740 = vunpack.c.l.b16 %v287
  %v741 = vunpack.c.l.b16 %v288
  %v742 = vunpack.c.l.b16 %v289
  %v743 = vunpack.c.l.b16 %v290
  %v744 = vunpack.c.l.b16 %v291
  %v745 = vunpack.c.l.b16 %v292
  %v746 = vunpack.c.l.b16 %v293
  %v747 = vunpack.c.l.b16 %v294
  %v748 = vunpack.c.l.b16 %v295
  %v749 = vunpack.c.l.b16 %v296
  %v750 = vunpack.c.l.b16 %v297
  %v751 = vpack.c.b16 %v728, %v727
  %v752 = vpack.c.b16 %v730, %v729
  %v753 = vpack.c.b16 %v732, %v731
  %v754 = vpack.c.b16 %v734, %v733
  %v755 = vpack.c.b16 %v736, %v735
  %v756 = vpack.c.b16 %v738, %v737
  %v757 = vpack.c.b16 %v740, %v739
  %v758 = vpack.c.b16 %v742, %v741
  %v759 = vpack.c.b16 %v744, %v743
  %v760 = vpack.c.b16 %v746, %v745
  %v761 = vpack.c.b16 %v748, %v747
  %v762 = vpack.c.b16 %v750, %v749
  %vm775 = vcmask 523264
  %v777 = vsel %vm775, %v696, 0
  %779 = vmatprep.subr.bf16.mxu0 0
  %780 = vmatpush1.bf16.msra.mxu0 %v751
  %781 = vmatprep.subr.bf16.mxu0 0
  %782 = vmatpush1.bf16.msra.mxu0 %v752
  %783 = vmatprep.subr.bf16.mxu0 0
  %784 = vmatpush1.bf16.msra.mxu0 %v753
  %785 = vmatprep.subr.bf16.mxu0 0
  %786 = vmatpush1.bf16.msra.mxu0 %v754
  %787 = vmatprep.subr.bf16.mxu0 0
  %788 = vmatpush1.bf16.msra.mxu0 %v755
  %789 = vmatprep.subr.bf16.mxu0 0
  %790 = vmatpush1.bf16.msra.mxu0 %v756
  %791 = vmatprep.subr.bf16.mxu0 0
  %792 = vmatpush1.bf16.msra.mxu0 %v757
  %793 = vmatprep.subr.bf16.mxu0 0
  %794 = vmatpush1.bf16.msra.mxu0 %v758
  %795 = vmatprep.subr.bf16.mxu0 0
  %796 = vmatpush1.bf16.msra.mxu0 %v759
  %797 = vmatprep.subr.bf16.mxu0 0
  %798 = vmatpush1.bf16.msra.mxu0 %v760
  %799 = vmatprep.subr.bf16.mxu0 0
  %800 = vmatpush1.bf16.msra.mxu0 %v761
  %801 = vmatprep.subr.bf16.mxu0 0
  %802 = vmatpush1.bf16.msra.mxu0 %v762
  %803 = vmatprep.subr.bf16.mxu0 0
  %804 = vmatpush1.bf16.msra.mxu0 0
  %805 = vmatprep.subr.bf16.mxu0 0
  %806 = vmatpush1.bf16.msra.mxu0 0
  %807 = vmatprep.subr.bf16.mxu0 0
  %808 = vmatpush1.bf16.msra.mxu0 0
  %809 = vmatprep.subr.bf16.mxu0 0
  %810 = vmatpush1.bf16.msra.mxu0 0
  %811 = vmatprep.mubr.bf16.mxu0 %v777
  %812 = vmatmul.mubr.bf16.gmra.mrb[0].mxu0 %v695
  %v813 = vpop.f32.mrb[0].mxu0
  %v814 = vadd.f32 %v701, %v813
  %v815 = vpop.f32.mrb[0].mxu0
  %v816 = vpop.f32.mrb[0].mxu0
  %v817 = vpop.f32.mrb[0].mxu0
  %818 = vdwg.mxu0
  %v819 = vmax.f32 %v814, 0.0
  %v820 = vpack.c.bf16 %v819, %v819
  %v822 = vlaneseq
  %v823 = vshrl.u32 %v822, 7
  %v824 = vsub.s32 0, %v823
  %v825 = vrot.slane %v315, %v824
  %v843 = vunpack.c.l.b16 %v299
  %v844 = vunpack.c.l.b16 %v300
  %v845 = vunpack.c.l.b16 %v301
  %v846 = vunpack.c.l.b16 %v302
  %v847 = vunpack.c.l.b16 %v303
  %v848 = vunpack.c.l.b16 %v304
  %v849 = vunpack.c.l.b16 %v305
  %v850 = vunpack.c.l.b16 %v306
  %v851 = vunpack.c.l.b16 %v307
  %v852 = vunpack.c.l.b16 %v308
  %v853 = vunpack.c.l.b16 %v309
  %v854 = vunpack.c.l.b16 %v310
  %v855 = vunpack.c.l.b16 %v311
  %v856 = vunpack.c.l.b16 %v312
  %v857 = vunpack.c.l.b16 %v313
  %v858 = vunpack.c.l.b16 %v314
  %v859 = vpack.c.b16 %v844, %v843
  %v860 = vpack.c.b16 %v846, %v845
  %v861 = vpack.c.b16 %v848, %v847
  %v862 = vpack.c.b16 %v850, %v849
  %v863 = vpack.c.b16 %v852, %v851
  %v864 = vpack.c.b16 %v854, %v853
  %v865 = vpack.c.b16 %v856, %v855
  %v866 = vpack.c.b16 %v858, %v857
  %875 = vmatprep.subr.bf16.mxu0 0
  %876 = vmatpush1.bf16.msra.mxu0 %v859
  %877 = vmatprep.subr.bf16.mxu0 0
  %878 = vmatpush1.bf16.msra.mxu0 %v860
  %879 = vmatprep.subr.bf16.mxu0 0
  %880 = vmatpush1.bf16.msra.mxu0 %v861
  %881 = vmatprep.subr.bf16.mxu0 0
  %882 = vmatpush1.bf16.msra.mxu0 %v862
  %883 = vmatprep.subr.bf16.mxu0 0
  %884 = vmatpush1.bf16.msra.mxu0 %v863
  %885 = vmatprep.subr.bf16.mxu0 0
  %886 = vmatpush1.bf16.msra.mxu0 %v864
  %887 = vmatprep.subr.bf16.mxu0 0
  %888 = vmatpush1.bf16.msra.mxu0 %v865
  %889 = vmatprep.subr.bf16.mxu0 0
  %890 = vmatpush1.bf16.msra.mxu0 %v866
  %891 = vmatprep.subr.bf16.mxu0 0
  %892 = vmatpush1.bf16.msra.mxu0 0
  %893 = vmatprep.subr.bf16.mxu0 0
  %894 = vmatpush1.bf16.msra.mxu0 0
  %895 = vmatprep.subr.bf16.mxu0 0
  %896 = vmatpush1.bf16.msra.mxu0 0
  %897 = vmatprep.subr.bf16.mxu0 0
  %898 = vmatpush1.bf16.msra.mxu0 0
  %899 = vmatprep.subr.bf16.mxu0 0
  %900 = vmatpush1.bf16.msra.mxu0 0
  %901 = vmatprep.subr.bf16.mxu0 0
  %902 = vmatpush1.bf16.msra.mxu0 0
  %903 = vmatprep.subr.bf16.mxu0 0
  %904 = vmatpush1.bf16.msra.mxu0 0
  %905 = vmatprep.subr.bf16.mxu0 0
  %906 = vmatpush1.bf16.msra.mxu0 0
  %907 = vmatprep.mubr.bf16.mxu0 0
  %908 = vmatmul.mubr.bf16.gmra.mrb[0].mxu0 %v820
  %v909 = vpop.f32.mrb[0].mxu0
  %v910 = vadd.f32 %v825, %v909
  %v911 = vpop.f32.mrb[0].mxu0
  %v912 = vpop.f32.mrb[0].mxu0
  %v913 = vpop.f32.mrb[0].mxu0
  %914 = vdwg.mxu0
  %v915 = vpack.c.bf16 %v910, %v910
  %v917 = vlaneseq
  %v918 = vshrl.u32 %v917, 7
  %v919 = vsub.s32 0, %v918
  %v920 = vrot.slane %v324, %v919
  %v930 = vunpack.c.l.b16 %v316
  %v931 = vunpack.c.l.b16 %v317
  %v932 = vunpack.c.l.b16 %v318
  %v933 = vunpack.c.l.b16 %v319
  %v934 = vunpack.c.l.b16 %v320
  %v935 = vunpack.c.l.b16 %v321
  %v936 = vunpack.c.l.b16 %v322
  %v937 = vunpack.c.l.b16 %v323
  %v938 = vpack.c.b16 %v931, %v930
  %v939 = vpack.c.b16 %v933, %v932
  %v940 = vpack.c.b16 %v935, %v934
  %v941 = vpack.c.b16 %v937, %v936
  %v947 = vsel %vm775, %v915, 0
  %949 = vmatprep.subr.bf16.mxu0 0
  %950 = vmatpush1.bf16.msra.mxu0 %v938
  %951 = vmatprep.subr.bf16.mxu0 0
  %952 = vmatpush1.bf16.msra.mxu0 %v939
  %953 = vmatprep.subr.bf16.mxu0 0
  %954 = vmatpush1.bf16.msra.mxu0 %v940
  %955 = vmatprep.subr.bf16.mxu0 0
  %956 = vmatpush1.bf16.msra.mxu0 %v941
  %957 = vmatprep.subr.bf16.mxu0 0
  %958 = vmatpush1.bf16.msra.mxu0 0
  %959 = vmatprep.subr.bf16.mxu0 0
  %960 = vmatpush1.bf16.msra.mxu0 0
  %961 = vmatprep.subr.bf16.mxu0 0
  %962 = vmatpush1.bf16.msra.mxu0 0
  %963 = vmatprep.subr.bf16.mxu0 0
  %964 = vmatpush1.bf16.msra.mxu0 0
  %965 = vmatprep.subr.bf16.mxu0 0
  %966 = vmatpush1.bf16.msra.mxu0 0
  %967 = vmatprep.subr.bf16.mxu0 0
  %968 = vmatpush1.bf16.msra.mxu0 0
  %969 = vmatprep.subr.bf16.mxu0 0
  %970 = vmatpush1.bf16.msra.mxu0 0
  %971 = vmatprep.subr.bf16.mxu0 0
  %972 = vmatpush1.bf16.msra.mxu0 0
  %973 = vmatprep.subr.bf16.mxu0 0
  %974 = vmatpush1.bf16.msra.mxu0 0
  %975 = vmatprep.subr.bf16.mxu0 0
  %976 = vmatpush1.bf16.msra.mxu0 0
  %977 = vmatprep.subr.bf16.mxu0 0
  %978 = vmatpush1.bf16.msra.mxu0 0
  %979 = vmatprep.subr.bf16.mxu0 0
  %980 = vmatpush1.bf16.msra.mxu0 0
  %981 = vmatprep.mubr.bf16.mxu0 0
  %982 = vmatmul.mubr.bf16.gmra.mrb[0].mxu0 %v947
  %v983 = vpop.f32.mrb[0].mxu0
  %v984 = vadd.f32 %v920, %v983
  %v985 = vpop.f32.mrb[0].mxu0
  %v986 = vpop.f32.mrb[0].mxu0
  %v987 = vpop.f32.mrb[0].mxu0
  %988 = vdwg.mxu0
  %v989 = vmax.f32 %v984, 0.0
  %v990 = vpack.c.bf16 %v989, %v989
  %v992 = vlaneseq
  %v993 = vshrl.u32 %v992, 7
  %v994 = vsub.s32 0, %v993
  %v995 = vrot.slane %v333, %v994
  %v1005 = vunpack.c.l.b16 %v325
  %v1006 = vunpack.c.l.b16 %v326
  %v1007 = vunpack.c.l.b16 %v327
  %v1008 = vunpack.c.l.b16 %v328
  %v1009 = vunpack.c.l.b16 %v329
  %v1010 = vunpack.c.l.b16 %v330
  %v1011 = vunpack.c.l.b16 %v331
  %v1012 = vunpack.c.l.b16 %v332
  %v1013 = vpack.c.b16 %v1006, %v1005
  %v1014 = vpack.c.b16 %v1008, %v1007
  %v1015 = vpack.c.b16 %v1010, %v1009
  %v1016 = vpack.c.b16 %v1012, %v1011
  %v1022 = vsel %vm775, %v990, 0
  %1024 = vmatprep.subr.bf16.mxu0 0
  %1025 = vmatpush1.bf16.msra.mxu0 %v1013
  %1026 = vmatprep.subr.bf16.mxu0 0
  %1027 = vmatpush1.bf16.msra.mxu0 %v1014
  %1028 = vmatprep.subr.bf16.mxu0 0
  %1029 = vmatpush1.bf16.msra.mxu0 %v1015
  %1030 = vmatprep.subr.bf16.mxu0 0
  %1031 = vmatpush1.bf16.msra.mxu0 %v1016
  %1032 = vmatprep.subr.bf16.mxu0 0
  %1033 = vmatpush1.bf16.msra.mxu0 0
  %1034 = vmatprep.subr.bf16.mxu0 0
  %1035 = vmatpush1.bf16.msra.mxu0 0
  %1036 = vmatprep.subr.bf16.mxu0 0
  %1037 = vmatpush1.bf16.msra.mxu0 0
  %1038 = vmatprep.subr.bf16.mxu0 0
  %1039 = vmatpush1.bf16.msra.mxu0 0
  %1040 = vmatprep.subr.bf16.mxu0 0
  %1041 = vmatpush1.bf16.msra.mxu0 0
  %1042 = vmatprep.subr.bf16.mxu0 0
  %1043 = vmatpush1.bf16.msra.mxu0 0
  %1044 = vmatprep.subr.bf16.mxu0 0
  %1045 = vmatpush1.bf16.msra.mxu0 0
  %1046 = vmatprep.subr.bf16.mxu0 0
  %1047 = vmatpush1.bf16.msra.mxu0 0
  %1048 = vmatprep.subr.bf16.mxu0 0
  %1049 = vmatpush1.bf16.msra.mxu0 0
  %1050 = vmatprep.subr.bf16.mxu0 0
  %1051 = vmatpush1.bf16.msra.mxu0 0
  %1052 = vmatprep.subr.bf16.mxu0 0
  %1053 = vmatpush1.bf16.msra.mxu0 0
  %1054 = vmatprep.subr.bf16.mxu0 0
  %1055 = vmatpush1.bf16.msra.mxu0 0
  %1056 = vmatprep.mubr.bf16.mxu0 0
  %1057 = vmatmul.mubr.bf16.gmra.mrb[0].mxu0 %v1022
  %v1058 = vpop.f32.mrb[0].mxu0
  %v1059 = vadd.f32 %v995, %v1058
  %v1060 = vpop.f32.mrb[0].mxu0
  %v1061 = vpop.f32.mrb[0].mxu0
  %v1062 = vpop.f32.mrb[0].mxu0
  %1063 = vdwg.mxu0
  %vm1064 = vcmask 15360
  %1065 = vst.msk [vmem:[%s13] sm:$0xff] %vm1064, %v1059
  // Predicated region
  $region54: #{tpu_custom_call.1} parent=0 // pred_check
    _
  $region55: #{tpu_custom_call.1} parent=0 // pred_check_branch
    %1067 = sbr.rel (0) target = $region57
  $region56: #{tpu_custom_call.1} parent=0 // pred_region
    _
  $region57: #{tpu_custom_call.1} parent=0 // pred_fallthru
    _
  // Predicated region
  $region58: #{tpu_custom_call.1} parent=0 // pred_check
    _
  $region59: #{tpu_custom_call.1} parent=0 // pred_check_branch
    %1069 = sbr.rel (0) target = $region61
  $region60: #{tpu_custom_call.1} parent=0 // pred_region
    _
  $region61: #{tpu_custom_call.1} parent=0 // pred_fallthru
    _

</llo_original>
